<compile_context>
chip_gen: v7x
topology: tpu7x:2x2x1
jax: 0.10.0
libtpu: 0.0.40
codegen_flags: <defaults>
</compile_context>

<pallas_src>
import math

import jax
import jax.numpy as jnp
from jax.experimental import pallas as pl
from jax.experimental.pallas import tpu as pltpu


_LANES = 128
_TARGET_BLOCK_BYTES = 4 * 1024 * 1024   # ~4 MiB activation block (HBM-bound copy)
_VMEM_LIMIT_BYTES = 32 * 1024 * 1024    # in+out double-buffered (~16 MiB) + headroom


def _drop_path_kernel(scale_ref, x_ref, o_ref):
    """One grid step == one (batch-tile, feature-tile) block.

    scale_ref : VMEM (tile_b, 1)      -- per-sample scale, in x.dtype
    x_ref     : VMEM (tile_b, tile_f)
    o_ref     : VMEM (tile_b, tile_f)
    """
    o_ref[...] = x_ref[...] * scale_ref[...]


def _choose_tiles(B: int, F: int, itemsize: int):
    """Pick (tile_b, tile_f) with block size ~= _TARGET_BLOCK_BYTES.

    Legality: each tile dim is either a multiple of the (sublane, lane) packing
    or equal to the full array dim; ragged last tiles are masked by Pallas.
    """
    sub_pack = max(8, 32 // itemsize)              # 8 f32, 16 bf16, 32 int8/fp8
    target_elems = max(_TARGET_BLOCK_BYTES // itemsize, _LANES * sub_pack)

    if F * sub_pack <= target_elems:
        # Whole feature dim fits in the budget even at the minimum batch tile:
        # keep the full feature dim and grow the batch tile to fill the block.
        tile_f = F                                  # equals full dim -> always legal
        rows = max(1, target_elems // max(F, 1))
        tile_b = B if B <= rows else max(sub_pack, (rows // sub_pack) * sub_pack)
    else:
        # Feature dim alone exceeds the budget: minimal batch tile, tile features.
        tile_b = B if B <= sub_pack else sub_pack
        per_row = max(_LANES, target_elems // max(tile_b, 1))
        tile_f = F if F <= per_row else max(_LANES, (per_row // _LANES) * _LANES)
    return tile_b, tile_f


def drop_path(x, drop_prob: float = 0.0, training: bool = False,
              scale_by_keep: bool = True, key=None):
    """Pallas DropPath. Matches torch `drop_path` semantics (per-sample mask).

    Note: the mask is drawn from an explicit JAX key (deterministic per key),
    unlike torch's global-RNG semantics. The key is required when training
    with drop_prob > 0.
    """
    if drop_prob == 0.0 or not training:
        return x
    if not jnp.issubdtype(x.dtype, jnp.floating):
        raise TypeError(f"drop_path only supports floating dtypes, got {x.dtype}")
    if key is None:
        raise ValueError("drop_path requires an explicit PRNG `key` when training "
                         "with drop_prob > 0 (no implicit global RNG).")

    keep_prob = 1.0 - drop_prob
    B = x.shape[0]
    F = math.prod(x.shape[1:]) if x.ndim > 1 else 1

    # ---- per-sample Bernoulli draw + scaling (mask is in x.dtype, like torch) ----
    keep = jax.random.bernoulli(key, p=keep_prob, shape=(B,))
    scale = keep.astype(x.dtype)
    if scale_by_keep and keep_prob > 0.0:
        scale = scale / jnp.asarray(keep_prob, dtype=x.dtype)
    scale = scale.reshape(B, 1)

    # ---- flat, lane-dense 2D view (free reshape, no pad / no trailing slice) ----
    x2 = x.reshape(B, F)
    itemsize = x.dtype.itemsize
    tile_b, tile_f = _choose_tiles(B, F, itemsize)
    grid = (pl.cdiv(B, tile_b), pl.cdiv(F, tile_f))

    out = pl.pallas_call(
        _drop_path_kernel,
        out_shape=jax.ShapeDtypeStruct((B, F), x.dtype),
        grid=grid,
        in_specs=[
            pl.BlockSpec((tile_b, 1), lambda i, j: (i, 0)),        # resident scale
            pl.BlockSpec((tile_b, tile_f), lambda i, j: (i, j)),   # activations
        ],
        out_specs=pl.BlockSpec((tile_b, tile_f), lambda i, j: (i, j)),
        compiler_params=pltpu.CompilerParams(
            # both axes are independent -> let Mosaic shard either on v7x megacore
            dimension_semantics=("parallel", "parallel"),
            vmem_limit_bytes=_VMEM_LIMIT_BYTES,
        ),
        cost_estimate=pl.CostEstimate(
            flops=B * F,
            transcendentals=0,
            bytes_accessed=2 * B * F * itemsize + B * itemsize,
        ),
    )(scale, x2)

    return out.reshape(x.shape)


class DropPath:
    """Drop paths (Stochastic Depth) per sample."""

    def __init__(self, drop_prob: float = 0.0, scale_by_keep: bool = True):
        self.drop_prob = drop_prob
        self.scale_by_keep = scale_by_keep
        self.training = True

    def __call__(self, x, key=None):
        return drop_path(x, self.drop_prob, self.training, self.scale_by_keep, key)


if __name__ == "__main__":
    import numpy as np

    root = jax.random.PRNGKey(0)
    kx, kmask = jax.random.split(root)

    B, C, H, W = 2, 4, 16, 16
    x = jax.random.normal(kx, (B, C, H, W), dtype=jnp.float32)

    module = DropPath(drop_prob=0.3, scale_by_keep=True)
    module.training = True

    y = jax.block_until_ready(module(x, key=kmask))

    # Sanity: each sample is either all-zero or x / keep_prob.
    keep_prob = 1.0 - module.drop_prob
    y_np = np.asarray(y)
    x_np = np.asarray(x)
    for b in range(B):
        zero = np.allclose(y_np[b], 0.0)
        scaled = np.allclose(y_np[b], x_np[b] / keep_prob, rtol=1e-5, atol=1e-5)
        assert zero or scaled, "per-sample DropPath semantics violated"

    # Cross-check against the exact mask drawn by the wrapper's RNG.
    keep_ref = np.asarray(jax.random.bernoulli(kmask, p=keep_prob, shape=(B,)))
    expected = x_np * (keep_ref.astype(np.float32) / keep_prob)[:, None, None, None]
    assert np.allclose(y_np, expected, rtol=1e-5, atol=1e-5)

    # Eval / drop_prob=0 path returns x unchanged (no key required).
    module.training = False
    y_eval = jax.block_until_ready(module(x))
    assert np.allclose(np.asarray(y_eval), x_np)

    print("KERNEL_OK")
</pallas_src>

<mosaic_0001>
module attributes {stable_mosaic.version = 11 : i64} {
  func.func @_drop_path_kernel(%arg0: i32, %arg1: i32, %arg2: memref<2x1xf32, #tpu.memory_space<vmem>>, %arg3: memref<2x1024xf32, #tpu.memory_space<vmem>>, %arg4: memref<2x1024xf32, #tpu.memory_space<vmem>>) attributes {dimension_semantics = [#tpu.dimension_semantics<parallel>, #tpu.dimension_semantics<parallel>], iteration_bounds = array<i64: 1, 1>, scalar_prefetch = 0 : i64, scratch_operands = 0 : i64, tpu.core_type = #tpu.core_type<tc>, window_params = [{transform_indices = @transform_0, window_bounds = array<i64: 2, 1>}, {transform_indices = @transform_1, window_bounds = array<i64: 2, 1024>}, {transform_indices = @transform_2, window_bounds = array<i64: 2, 1024>}]} {
    %c0 = arith.constant 0 : index
    %c0_0 = arith.constant 0 : index
    %0 = vector.load %arg3[%c0, %c0_0] : memref<2x1024xf32, #tpu.memory_space<vmem>>, vector<2x1024xf32>
    %c0_1 = arith.constant 0 : index
    %c0_2 = arith.constant 0 : index
    %1 = vector.load %arg2[%c0_1, %c0_2] : memref<2x1xf32, #tpu.memory_space<vmem>>, vector<2x1xf32>
    %2 = vector.broadcast %1 : vector<2x1xf32> to vector<2x1024xf32>
    %3 = arith.mulf %0, %2 : vector<2x1024xf32>
    %c0_3 = arith.constant 0 : index
    %c0_4 = arith.constant 0 : index
    %4 = vector.load %arg4[%c0_3, %c0_4] : memref<2x1024xf32, #tpu.memory_space<vmem>>, vector<2x1024xf32>
    tpu.vector_store %arg4[%c0_3, %c0_4], %3 {strides = array<i32>} : memref<2x1024xf32, #tpu.memory_space<vmem>>, vector<2x1024xf32>,
    return
  }
  func.func @transform_0(%arg0: i32, %arg1: i32) -> (i32, i32) {
    %c0_i32 = arith.constant 0 : i32
    %c0_i32_0 = arith.constant 0 : i32
    return %arg0, %c0_i32 : i32, i32
  }
  func.func @transform_1(%arg0: i32, %arg1: i32) -> (i32, i32) {
    %c0_i32 = arith.constant 0 : i32
    return %arg0, %arg1 : i32, i32
  }
  func.func @transform_2(%arg0: i32, %arg1: i32) -> (i32, i32) {
    %c0_i32 = arith.constant 0 : i32
    return %arg0, %arg1 : i32, i32
  }
}

</mosaic_0001>

<llo_original>
// kernel: tpu_custom_call.1
$region0: #{tpu_custom_call.1}
  #allocation0 [shape = 'u32[]', space=smem, size = 0x4, offset = 0x4, fixed_abs, tag = 'smem constant byte address 0x4 - core index']
  #allocation1 [shape = 'u32[144,128]{1,0:T(1,128)}', space=vmem, size = 0x12000, scoped, tag = 'internal scratch']
  %s0 = inlined_call_operand.vmem [shape: f32[2,1], index: 0, kind: input, shape index: {}]
  %s1 = inlined_call_operand.hbm [shape: f32[2,1024], index: 1, kind: input, shape index: {}]
  %s2 = inlined_call_operand.hbm [shape: f32[2,1024], index: 2, kind: output, shape index: {}]
  %s3 = sld [smem:[#allocation0]]
  $region22: #{tpu_custom_call.1} parent=0
    _
  %s5 = ssub.s32 1, %s3
  %s6 = scalar_select 0, %s5, %s3
  $region1: #{tpu_custom_call.1} parent=0
    #allocation2 [shape = 'u8[8192]{0}', space=vmem, size = 0x2000, scoped, tag = 'input window, operand 1, single buffered']
    #allocation3 [shape = 's32[1]{0}', space=sflag, size = 0x4, scoped, tag = 'scoped memory for tpu_custom_call.1']
    #allocation4 [shape = 's32[1]{0}', space=sflag, size = 0x4, scoped, tag = 'scoped memory for tpu_custom_call.1']
    #allocation5 [shape = 'u8[8192]{0}', space=vmem, size = 0x2000, scoped, tag = 'output window, operand 0, single buffered']
    %7 = vsyncpa [#allocation3], 0
    %8 = vsyncpa [#allocation4], 0
    // Predicated region
    $region2: #{tpu_custom_call.1} parent=1 // pred_check
      _
    $region3: #{tpu_custom_call.1} parent=1 // pred_check_branch
      %10 = sbr.rel (0) target = $region5
    $region4: #{tpu_custom_call.1} parent=1 // pred_region
      _
    $region5: #{tpu_custom_call.1} parent=1 // pred_fallthru
      _
    // Predicated region
    $region6: #{tpu_custom_call.1} parent=1 // pred_check
      _
    $region7: #{tpu_custom_call.1} parent=1 // pred_check_branch
      %12 = sbr.rel (0) target = $region9
    $region8: #{tpu_custom_call.1} parent=1 // pred_region
      %s14 = ssub.s32 256, 256
      %15 = vsyncadd [#allocation3], %s14
      %s17 = sshll.u32 [#allocation2], 4
      %s18 = int_to_ptr.vmem [resolvable:$true] %s17
      %20 = dma.hbm_to_vmem [thread:$0]  %s1, 256, %s18, [#allocation3]
    $region9: #{tpu_custom_call.1} parent=1 // pred_fallthru
      _
    // Predicated region
    $region10: #{tpu_custom_call.1} parent=1 // pred_check
      _
    $region11: #{tpu_custom_call.1} parent=1 // pred_check_branch
      %22 = sbr.rel (0) target = $region13
    $region12: #{tpu_custom_call.1} parent=1 // pred_region
      %23 = dma.done [#allocation3], 256
    $region13: #{tpu_custom_call.1} parent=1 // pred_fallthru
      _
    %v24 = vld [vmem:[#allocation2] sm:$0xff]
    %v25 = vld [vmem:[#allocation2 + $0x8] sm:$0xff]
    %v26 = vld [vmem:[%s0] sm:$0x3]
    %28 = vset.pattern.permute.xlu0 0
    %29 = vperm.xlu0 %28, %v26
    %v30 = vpop.permute.xlu0 %29
    %v32 = vunpack.c.l.s4 269488144
    %v33 = vunpack.c.0.s8 %v32
    %v34 = vlaneseq
    %v35 = vshrl.u32 %v34, 7
    %v36 = vsub.s32 %v33, %v35
    %v37 = vrot.slane %v30, %v36
    %v39 = vmul.f32 %v24, %v37
    %v40 = vmul.f32 %v25, %v37
    %41 = vst [vmem:[#allocation5] sm:$0xff] %v39
    %42 = vst [vmem:[#allocation5 + $0x8] sm:$0xff] %v40
    // Predicated region
    $region14: #{tpu_custom_call.1} parent=1 // pred_check
      _
    $region15: #{tpu_custom_call.1} parent=1 // pred_check_branch
      %44 = sbr.rel (0) target = $region17
    $region16: #{tpu_custom_call.1} parent=1 // pred_region
      %s46 = ssub.s32 256, 256
      %47 = vsyncadd [#allocation4], %s46
      %s49 = sshll.u32 [#allocation5], 4
      %s50 = int_to_ptr.vmem [resolvable:$true] %s49
      %52 = dma.vmem_to_hbm [thread:$0]  %s50, 256, %s2, [#allocation4]
    $region17: #{tpu_custom_call.1} parent=1 // pred_fallthru
      _
    // Predicated region
    $region18: #{tpu_custom_call.1} parent=1 // pred_check
      _
    $region19: #{tpu_custom_call.1} parent=1 // pred_check_branch
      %54 = sbr.rel (0) target = $region21
    $region20: #{tpu_custom_call.1} parent=1 // pred_region
      %55 = dma.done [#allocation4], 256
    $region21: #{tpu_custom_call.1} parent=1 // pred_fallthru
      _
    %56 = vsyncpa [#allocation3], 1
    %57 = vsyncpa [#allocation4], 1

</llo_original>
